<compile_context>
chip_gen: v6e
topology: v6e:2x2x1
jax: 0.10.0
libtpu: 0.0.40
codegen_flags: <defaults>
</compile_context>

<pallas_src>
import jax
import jax.numpy as jnp
from jax.experimental import pallas as pl
from jax.experimental.pallas import tpu as pltpu

_EPS = 1e-12  # F.normalize default eps


def _cosine_linear_kernel(x_ref, w_ref, wnorm_ref, cos_ref):
    x = x_ref[...].astype(jnp.float32)   # (B, K)   -- same block every grid step
    w = w_ref[...].astype(jnp.float32)   # (K, TN)  -- column slab of weight

    # Column-wise weight normalization via rsqrt + multiply (no per-element div).
    # max(sqrt(s), eps) == sqrt(max(s, eps^2)), so rsqrt(max(s, eps^2)) preserves
    # F.normalize semantics exactly.
    w_sq = jnp.sum(w * w, axis=0, keepdims=True)               # (1, TN)
    w_inv = jax.lax.rsqrt(jnp.maximum(w_sq, _EPS * _EPS))      # (1, TN)
    wn = w * w_inv
    wnorm_ref[...] = wn.astype(wnorm_ref.dtype)

    # Row norms of x: tiny (B, K) reduction, recomputed per tile (cheap vs. the
    # K*TN weight work) so the grid axis stays safely "parallel" across cores.
    x_sq = jnp.sum(x * x, axis=-1, keepdims=True)              # (B, 1)
    x_inv = jax.lax.rsqrt(jnp.maximum(x_sq, _EPS * _EPS))      # (B, 1)

    # cos = (x @ w_n) scaled by 1/||x||: B*TN multiplies instead of B*K divides.
    cos = jnp.dot(x, wn, preferred_element_type=jnp.float32) * x_inv
    cos_ref[...] = cos.astype(cos_ref.dtype)


def cosine_linear(x, weight, *, block_n=None):
    """Pallas forward of CosineLinear. Returns (w_norm, cos_theta)."""
    batch, k = x.shape
    k_w, n = weight.shape
    assert k == k_w, "in_features mismatch between x and weight"

    # --- Tile size over out_features (lane axis) ---------------------------
    if block_n is None:
        # Keep one f32 weight tile around ~4 MiB so 4 VMEM copies (input +
        # w_norm output, each double-buffered) fit comfortably even on v7x.
        budget_cols = (4 * 1024 * 1024) // (k * 4)
        block_n = max(128, min(2048, (budget_cols // 128) * 128))
    n_ceil = pl.cdiv(n, 128) * 128
    tn = max(128, (min(block_n, n_ceil) // 128) * 128)

    # --- Pad for full, unmasked lane-dense tiles ----------------------------
    b_pad = max(8, pl.cdiv(batch, 8) * 8)
    n_pad = pl.cdiv(n, tn) * tn
    x_p = x if b_pad == batch else jnp.pad(x, ((0, b_pad - batch), (0, 0)))
    w_p = weight if n_pad == n else jnp.pad(weight, ((0, 0), (0, n_pad - n)))

    grid = (n_pad // tn,)

    wnorm_shape = jax.ShapeDtypeStruct((k, n_pad), weight.dtype)
    cos_shape = jax.ShapeDtypeStruct((b_pad, n_pad), x.dtype)

    wn_p, cos_p = pl.pallas_call(
        _cosine_linear_kernel,
        out_shape=(wnorm_shape, cos_shape),
        grid=grid,
        in_specs=[
            pl.BlockSpec((b_pad, k), lambda j: (0, 0)),   # x: whole, reused
            pl.BlockSpec((k, tn), lambda j: (0, j)),      # weight: column slab
        ],
        out_specs=(
            pl.BlockSpec((k, tn), lambda j: (0, j)),      # w_norm column slab
            pl.BlockSpec((b_pad, tn), lambda j: (0, j)),  # cos column slab
        ),
        compiler_params=pltpu.CompilerParams(
            dimension_semantics=("parallel",),            # megacore-shardable
            vmem_limit_bytes=48 * 1024 * 1024,            # < v7x 64 MiB physical
        ),
    )(x_p, w_p)

    wn = wn_p if n_pad == n else wn_p[:, :n]
    cos = cos_p if (n_pad == n and b_pad == batch) else cos_p[:batch, :n]
    return wn, cos


def _xavier_uniform(key, shape, dtype=jnp.float32):
    # nn.init.xavier_uniform_ on a (in_features, out_features) tensor.
    bound = (6.0 / (shape[0] + shape[1])) ** 0.5
    return jax.random.uniform(key, shape, dtype=dtype, minval=-bound, maxval=bound)


if __name__ == "__main__":
    key = jax.random.PRNGKey(0)
    k_x, k_w = jax.random.split(key)

    batch = 8
    in_features = 64
    out_features = 512

    x = jax.random.normal(k_x, (batch, in_features), dtype=jnp.float32)
    weight = _xavier_uniform(k_w, (in_features, out_features), dtype=jnp.float32)

    # block_n=256 so the small demo still exercises a multi-step grid (2 tiles).
    w_norm, cos_theta = cosine_linear(x, weight, block_n=256)
    jax.block_until_ready((w_norm, cos_theta))

    # Reference check in plain JAX (same semantics as the PyTorch forward).
    xn_ref = x / jnp.maximum(jnp.linalg.norm(x, axis=-1, keepdims=True), _EPS)
    wn_ref = weight / jnp.maximum(jnp.linalg.norm(weight, axis=0, keepdims=True), _EPS)
    cos_ref = xn_ref @ wn_ref
    assert w_norm.shape == wn_ref.shape and cos_theta.shape == cos_ref.shape
    assert jnp.allclose(w_norm, wn_ref, atol=1e-5, rtol=1e-5)
    assert jnp.allclose(cos_theta, cos_ref, atol=1e-5, rtol=1e-5)

    print("KERNEL_OK")
</pallas_src>

<mosaic_0001>
module attributes {stable_mosaic.version = 11 : i64} {
  func.func @_cosine_linear_kernel(%arg0: i32, %arg1: memref<8x64xf32, #tpu.memory_space<vmem>>, %arg2: memref<64x256xf32, #tpu.memory_space<vmem>>, %arg3: memref<64x256xf32, #tpu.memory_space<vmem>>, %arg4: memref<8x256xf32, #tpu.memory_space<vmem>>) attributes {dimension_semantics = [#tpu.dimension_semantics<parallel>], iteration_bounds = array<i64: 2>, scalar_prefetch = 0 : i64, scratch_operands = 0 : i64, tpu.core_type = #tpu.core_type<tc>, window_params = [{pipeline_mode = #tpu.pipeline_mode<synchronous>, transform_indices = @transform_0, window_bounds = array<i64: 8, 64>}, {transform_indices = @transform_1, window_bounds = array<i64: 64, 256>}, {transform_indices = @transform_2, window_bounds = array<i64: 64, 256>}, {transform_indices = @transform_3, window_bounds = array<i64: 8, 256>}]} {
    %c0 = arith.constant 0 : index
    %c0_0 = arith.constant 0 : index
    %0 = vector.load %arg1[%c0, %c0_0] : memref<8x64xf32, #tpu.memory_space<vmem>>, vector<8x64xf32>
    %c0_1 = arith.constant 0 : index
    %c0_2 = arith.constant 0 : index
    %1 = vector.load %arg2[%c0_1, %c0_2] : memref<64x256xf32, #tpu.memory_space<vmem>>, vector<64x256xf32>
    %2 = arith.mulf %1, %1 : vector<64x256xf32>
    %cst = arith.constant dense<0.000000e+00> : vector<256xf32>
    %3 = vector.multi_reduction <add>, %2, %cst [0] : vector<64x256xf32> to vector<256xf32>
    %4 = vector.shape_cast %3 : vector<256xf32> to vector<1x256xf32>
    %cst_3 = arith.constant 1.000000e-24 : f32
    %5 = vector.broadcast %cst_3 : f32 to vector<1x256xf32>
    %6 = arith.maximumf %4, %5 : vector<1x256xf32>
    %7 = math.rsqrt %6 : vector<1x256xf32>
    %8 = vector.broadcast %7 : vector<1x256xf32> to vector<64x256xf32>
    %9 = arith.mulf %1, %8 : vector<64x256xf32>
    %c0_4 = arith.constant 0 : index
    %c0_5 = arith.constant 0 : index
    %10 = vector.load %arg3[%c0_4, %c0_5] : memref<64x256xf32, #tpu.memory_space<vmem>>, vector<64x256xf32>
    tpu.vector_store %arg3[%c0_4, %c0_5], %9 {strides = array<i32>} : memref<64x256xf32, #tpu.memory_space<vmem>>, vector<64x256xf32>,
    %11 = arith.mulf %0, %0 : vector<8x64xf32>
    %cst_6 = arith.constant dense<0.000000e+00> : vector<8xf32>
    %12 = vector.multi_reduction <add>, %11, %cst_6 [1] : vector<8x64xf32> to vector<8xf32>
    %13 = vector.shape_cast %12 : vector<8xf32> to vector<8x1xf32>
    %cst_7 = arith.constant 1.000000e-24 : f32
    %14 = vector.broadcast %cst_7 : f32 to vector<8x1xf32>
    %15 = arith.maximumf %13, %14 : vector<8x1xf32>
    %16 = math.rsqrt %15 : vector<8x1xf32>
    %cst_8 = arith.constant dense<0.000000e+00> : vector<8x256xf32>
    %17 = tpu.matmul %0, %9, %cst_8 {dimension_numbers = #tpu.dot_dimension_numbers<[1], [0], [0], [1], [0, 0, 1, 1], [], []>} : vector<8x64xf32>, vector<64x256xf32>, vector<8x256xf32> -> vector<8x256xf32>
    %18 = vector.broadcast %16 : vector<8x1xf32> to vector<8x256xf32>
    %19 = arith.mulf %17, %18 : vector<8x256xf32>
    %c0_9 = arith.constant 0 : index
    %c0_10 = arith.constant 0 : index
    %20 = vector.load %arg4[%c0_9, %c0_10] : memref<8x256xf32, #tpu.memory_space<vmem>>, vector<8x256xf32>
    tpu.vector_store %arg4[%c0_9, %c0_10], %19 {strides = array<i32>} : memref<8x256xf32, #tpu.memory_space<vmem>>, vector<8x256xf32>,
    return
  }
  func.func @transform_0(%arg0: i32) -> (i32, i32) {
    %c0_i32 = arith.constant 0 : i32
    %c0_i32_0 = arith.constant 0 : i32
    %c0_i32_1 = arith.constant 0 : i32
    return %c0_i32, %c0_i32_0 : i32, i32
  }
  func.func @transform_1(%arg0: i32) -> (i32, i32) {
    %c0_i32 = arith.constant 0 : i32
    %c0_i32_0 = arith.constant 0 : i32
    return %c0_i32, %arg0 : i32, i32
  }
  func.func @transform_2(%arg0: i32) -> (i32, i32) {
    %c0_i32 = arith.constant 0 : i32
    %c0_i32_0 = arith.constant 0 : i32
    return %c0_i32, %arg0 : i32, i32
  }
  func.func @transform_3(%arg0: i32) -> (i32, i32) {
    %c0_i32 = arith.constant 0 : i32
    %c0_i32_0 = arith.constant 0 : i32
    return %c0_i32, %arg0 : i32, i32
  }
}

</mosaic_0001>

<llo_original>
// kernel: tpu_custom_call.1
$region0: #{tpu_custom_call.1}
  #allocation0 [shape = 'u32[]', space=smem, size = 0x4, offset = 0x4, fixed_abs, tag = 'smem constant byte address 0x4 - core index']
  #allocation1 [shape = 'u32[144,128]{1,0:T(1,128)}', space=vmem, size = 0x12000, scoped, tag = 'internal scratch']
  %s0 = inlined_call_operand.hbm [shape: f32[8,64], index: 0, kind: input, shape index: {}]
  %s1 = inlined_call_operand.hbm [shape: f32[64,512], index: 1, kind: input, shape index: {}]
  %s2 = inlined_call_operand.hbm [shape: f32[64,512], index: 2, kind: output, shape index: {0}]
  %s3 = inlined_call_operand.hbm [shape: f32[8,512], index: 3, kind: output, shape index: {1}]
  %4 = xla_tuple %s2, %s3
  %s5 = sld [smem:[#allocation0]]
  $region57: #{tpu_custom_call.1} parent=0
    _
  %s7 = ssub.s32 1, %s5
  %s8 = scalar_select 0, %s7, %s5
  $region1: #{tpu_custom_call.1} parent=0
    #allocation2 [shape = 'u8[4096]{0}', space=vmem, size = 0x1000, scoped, tag = 'input window, operand 0, single buffered']
    #allocation3 [shape = 's32[2]{0}', space=sflag, size = 0x8, scoped, tag = 'scoped memory for tpu_custom_call.1']
    #allocation4 [shape = 's32[2]{0}', space=sflag, size = 0x8, scoped, tag = 'scoped memory for tpu_custom_call.1']
    #allocation5 [shape = 'u8[131072]{0}', space=vmem, size = 0x20000, scoped, tag = 'input window, operand 1']
    #allocation6 [shape = 's32[2]{0}', space=sflag, size = 0x8, scoped, tag = 'scoped memory for tpu_custom_call.1']
    #allocation7 [shape = 'u8[131072]{0}', space=vmem, size = 0x20000, scoped, tag = 'output window, operand 0']
    #allocation8 [shape = 'u8[16384]{0}', space=vmem, size = 0x4000, scoped, tag = 'output window, operand 1']
    #allocation9 [shape = 's32[2]{0}', space=sflag, size = 0x8, scoped, tag = 'scoped memory for tpu_custom_call.1']
    %9 = vsyncpa [#allocation3], 0
    %10 = vsyncpa [#allocation6], 0
    %s11 = scalar_lea.sflag [#allocation6], 1
    %12 = vsyncpa %s11, 0
    %13 = vsyncpa [#allocation4], 0
    %s14 = scalar_lea.sflag [#allocation4], 1
    %15 = vsyncpa %s14, 0
    %16 = vsyncpa [#allocation9], 0
    %s17 = scalar_lea.sflag [#allocation9], 1
    %18 = vsyncpa %s17, 0
    loop: start=0, step=1, limit=4
    $region2: #{tpu_custom_call.1} parent=1 // loop_pre_header
      _
    $region3: #{tpu_custom_call.1} parent=1 // loop_header
      %s20 = sphi 0, %s24
      %p21 = scmp.ge.s32.totalorder %s20, 4
      %s28 = sphi 0, %s28
      %s30 = sphi 0, %s28
      %s31 = sphi 0, %s30
      %s45 = sphi 0, %s31
      %s51 = sphi 0, %s53
      %s54 = sphi 0, %s51
      %s55 = sphi 0, %s54
      %s71 = sphi 0, %s55
      %s77 = sphi 0, %s79
      %s80 = sphi 0, %s77
      %s81 = sphi 0, %s80
      %s97 = sphi 0, %s81
      %s103 = sphi 0, %s105
      %s106 = sphi 0, %s103
      %s107 = sphi 0, %s106
      %s123 = sphi 0, %s107
    $region4: #{tpu_custom_call.1} parent=1 // loop_header_branch
      %23 = sbr.rel (%p21) target = $region8
    $region5: #{tpu_custom_call.1} parent=1 // loop_body
      %s25 = ssub.s32 %s20, 1
      %s26 = ssub.s32 %s20, 2
      %s27 = sadd.s32 %s20, 1
      %s29 = sadd.s32 %s28, 1
      %p32 = scmp.eq.s32.totalorder %s20, 1
      %p33 = scmp.ne.s32.totalorder %s28, %s30
      %p34 = scmp.eq.s32.totalorder %s20, 0
      %p35 = por %p33, %p34
      %p36 = scmp.ne.s32.totalorder %s28, %s30
      %p37 = scmp.eq.s32.totalorder %s25, 1
      %p38 = por %p36, %p37
      %p39 = scmp.ne.s32.totalorder %s30, %s31
      %p40 = scmp.eq.s32.totalorder %s25, 0
      %p41 = por %p39, %p40
      %p42 = scmp.ne.s32.totalorder %s30, %s31
      %p43 = scmp.eq.s32.totalorder %s26, 1
      %p44 = por %p42, %p43
      %p46 = scmp.ne.s32.totalorder %s31, %s45
      %p47 = scmp.eq.s32.totalorder %s26, 0
      %p48 = por %p46, %p47
      %s49 = ssub.s32 %s20, %s27
      %p50 = scmp.eq.s32.totalorder %s49, 0
      %s52 = sadd.s32 %s51, 1
      %s53 = scalar_select %p50, %s51, %s52
      %p56 = pneg %p50
      %p57 = scmp.eq.s32.totalorder %s20, 1
      %p58 = por %p56, %p57
      %p59 = scmp.ne.s32.totalorder %s51, %s54
      %p60 = scmp.eq.s32.totalorder %s20, 0
      %p61 = por %p59, %p60
      %p62 = scmp.ne.s32.totalorder %s51, %s54
      %p63 = scmp.eq.s32.totalorder %s25, 1
      %p64 = por %p62, %p63
      %p65 = scmp.ne.s32.totalorder %s54, %s55
      %p66 = scmp.eq.s32.totalorder %s25, 0
      %p67 = por %p65, %p66
      %p68 = scmp.ne.s32.totalorder %s54, %s55
      %p69 = scmp.eq.s32.totalorder %s26, 1
      %p70 = por %p68, %p69
      %p72 = scmp.ne.s32.totalorder %s55, %s71
      %p73 = scmp.eq.s32.totalorder %s26, 0
      %p74 = por %p72, %p73
      %s75 = ssub.s32 %s20, %s27
      %p76 = scmp.eq.s32.totalorder %s75, 0
      %s78 = sadd.s32 %s77, 1
      %s79 = scalar_select %p76, %s77, %s78
      %p82 = pneg %p76
      %p83 = scmp.eq.s32.totalorder %s20, 1
      %p84 = por %p82, %p83
      %p85 = scmp.ne.s32.totalorder %s77, %s80
      %p86 = scmp.eq.s32.totalorder %s20, 0
      %p87 = por %p85, %p86
      %p88 = scmp.ne.s32.totalorder %s77, %s80
      %p89 = scmp.eq.s32.totalorder %s25, 1
      %p90 = por %p88, %p89
      %p91 = scmp.ne.s32.totalorder %s80, %s81
      %p92 = scmp.eq.s32.totalorder %s25, 0
      %p93 = por %p91, %p92
      %p94 = scmp.ne.s32.totalorder %s80, %s81
      %p95 = scmp.eq.s32.totalorder %s26, 1
      %p96 = por %p94, %p95
      %p98 = scmp.ne.s32.totalorder %s81, %s97
      %p99 = scmp.eq.s32.totalorder %s26, 0
      %p100 = por %p98, %p99
      %s101 = ssub.s32 %s20, %s27
      %p102 = scmp.eq.s32.totalorder %s101, 0
      %s104 = sadd.s32 %s103, 1
      %s105 = scalar_select %p102, %s103, %s104
      %p108 = pneg %p102
      %p109 = scmp.eq.s32.totalorder %s20, 1
      %p110 = por %p108, %p109
      %p111 = scmp.ne.s32.totalorder %s103, %s106
      %p112 = scmp.eq.s32.totalorder %s20, 0
      %p113 = por %p111, %p112
      %p114 = scmp.ne.s32.totalorder %s103, %s106
      %p115 = scmp.eq.s32.totalorder %s25, 1
      %p116 = por %p114, %p115
      %p117 = scmp.ne.s32.totalorder %s106, %s107
      %p118 = scmp.eq.s32.totalorder %s25, 0
      %p119 = por %p117, %p118
      %p120 = scmp.ne.s32.totalorder %s106, %s107
      %p121 = scmp.eq.s32.totalorder %s26, 1
      %p122 = por %p120, %p121
      %p124 = scmp.ne.s32.totalorder %s107, %s123
      %p125 = scmp.eq.s32.totalorder %s26, 0
      %p126 = por %p124, %p125
      %p127 = scmp.le.s32.totalorder 1, %s20
      %p128 = scmp.lt.s32.totalorder %s20, 3
      %p129 = pnand %p127, %p128
      %p130 = pneg %p129
      // Predicated region
      $region9: #{tpu_custom_call.1} parent=5 // pred_check
        _
      $region10: #{tpu_custom_call.1} parent=5 // pred_check_branch
        %132 = sbr.rel (%p129) target = $region12
      $region11: #{tpu_custom_call.1} parent=5 // pred_region
        %s133 = ssub.s32 %s20, 1
        // Predicated region
        $region13: #{tpu_custom_call.1} parent=11 // pred_check
          %p134 = pneg %p41
        $region14: #{tpu_custom_call.1} parent=11 // pred_check_branch
          %136 = sbr.rel (%p134) target = $region16
        $region15: #{tpu_custom_call.1} parent=11 // pred_region
          %s138 = ssub.s32 128, 128
          %139 = vsyncadd [#allocation3], %s138
          %s141 = sshll.u32 [#allocation2], 4
          %s142 = int_to_ptr.vmem [resolvable:$true] %s141
          %144 = dma.hbm_to_vmem [thread:$0]  %s0, 128, %s142, [#allocation3]
        $region16: #{tpu_custom_call.1} parent=11 // pred_fallthru
          _
      $region12: #{tpu_custom_call.1} parent=5 // pred_fallthru
        _
      %p145 = scmp.lt.s32.totalorder %s20, 2
      // Predicated region
      $region17: #{tpu_custom_call.1} parent=5 // pred_check
        %p146 = pneg %p145
      $region18: #{tpu_custom_call.1} parent=5 // pred_check_branch
        %148 = sbr.rel (%p146) target = $region20
      $region19: #{tpu_custom_call.1} parent=5 // pred_region
        // Predicated region
        $region21: #{tpu_custom_call.1} parent=19 // pred_check
          %p149 = pneg %p61
        $region22: #{tpu_custom_call.1} parent=19 // pred_check_branch
          %151 = sbr.rel (%p149) target = $region24
        $region23: #{tpu_custom_call.1} parent=19 // pred_region
          %s152 = sand.u32 %s51, 1
          %s153 = scalar_lea.sflag [#allocation6], %s152
          %s154 = sand.u32 %s51, 1
          %s155 = smul.addr %s154, 128
          %s156 = scalar_lea.vmem [#allocation5], %s155
          %s157 = smul.u32 2, %s20
          %s159 = ssub.s32 2048, 2048
          %160 = vsyncadd %s153, %s159
          %s161 = smul.addr %s157, 128
          %s162 = scalar_lea.hbm %s1, %s161
          %s163 = sshll.u32 %s156, 4
          %s164 = int_to_ptr.vmem [resolvable:$true] %s163
          %169 = dma.hbm_to_vmem [thread:$0]  %s162, 2048, %s164, %s153, 512, 256, 16
        $region24: #{tpu_custom_call.1} parent=19 // pred_fallthru
          _
      $region20: #{tpu_custom_call.1} parent=5 // pred_fallthru
        _
      %p170 = scmp.le.s32.totalorder 1, %s20
      %p171 = scmp.lt.s32.totalorder %s20, 3
      %p172 = pnand %p170, %p171
      %p173 = pneg %p172
      // Predicated region
      $region25: #{tpu_custom_call.1} parent=5 // pred_check
        _
      $region26: #{tpu_custom_call.1} parent=5 // pred_check_branch
        %175 = sbr.rel (%p172) target = $region28
      $region27: #{tpu_custom_call.1} parent=5 // pred_region
        %s176 = ssub.s32 %s20, 1
        // Predicated region
        $region29: #{tpu_custom_call.1} parent=27 // pred_check
          %p177 = pneg %p41
        $region30: #{tpu_custom_call.1} parent=27 // pred_check_branch
          %179 = sbr.rel (%p177) target = $region32
        $region31: #{tpu_custom_call.1} parent=27 // pred_region
          %180 = dma.done [#allocation3], 128
        $region32: #{tpu_custom_call.1} parent=27 // pred_fallthru
          _
        %s181 = sand.u32 %s54, 1
        %s182 = scalar_lea.sflag [#allocation6], %s181
        %s183 = sand.u32 %s54, 1
        %s184 = smul.addr %s183, 128
        %s185 = scalar_lea.vmem [#allocation5], %s184
        // Predicated region
        $region33: #{tpu_custom_call.1} parent=27 // pred_check
          %p186 = pneg %p67
        $region34: #{tpu_custom_call.1} parent=27 // pred_check_branch
          %188 = sbr.rel (%p186) target = $region36
        $region35: #{tpu_custom_call.1} parent=27 // pred_region
          %189 = dma.done %s182, 2048
        $region36: #{tpu_custom_call.1} parent=27 // pred_fallthru
          _
        %p190 = pneg %p41
        %p191 = pneg %p38
        %s192 = sand.u32 %s54, 1
        %s193 = scalar_lea.sflag [#allocation6], %s192
        %s194 = sand.u32 %s54, 1
        %s195 = smul.addr %s194, 128
        %s196 = scalar_lea.vmem [#allocation5], %s195
        %p197 = pneg %p67
        %p198 = pneg %p64
        %p199 = pneg %p93
        %p200 = pneg %p90
        %s201 = sand.u32 %s80, 1
        %s202 = scalar_lea.sflag [#allocation4], %s201
        %s203 = sand.u32 %s80, 1
        %s204 = smul.addr %s203, 128
        %s205 = scalar_lea.vmem [#allocation7], %s204
        %p206 = pneg %p119
        %p207 = pneg %p116
        %s208 = sand.u32 %s106, 1
        %s209 = scalar_lea.sflag [#allocation9], %s208
        %s210 = sand.u32 %s106, 1
        %s211 = smul.addr %s210, 16
        %s212 = scalar_lea.vmem [#allocation8], %s211
        %s213 = smul.u32 2, %s25
        %s214 = smul.u32 2, %s25
        %s215 = smul.u32 2, %s25
        %v216 = vld [vmem:[#allocation2] sm:$0xff]
        %v217 = vld [vmem:[%s185] sm:$0xff]
        %v218 = vld [vmem:[%s185 + $0x8] sm:$0xff]
        %v219 = vld [vmem:[%s185 + $0x10] sm:$0xff]
        %v220 = vld [vmem:[%s185 + $0x18] sm:$0xff]
        %v221 = vld [vmem:[%s185 + $0x20] sm:$0xff]
        %v222 = vld [vmem:[%s185 + $0x28] sm:$0xff]
        %v223 = vld [vmem:[%s185 + $0x30] sm:$0xff]
        %v224 = vld [vmem:[%s185 + $0x38] sm:$0xff]
        %v225 = vld [vmem:[%s185 + $0x40] sm:$0xff]
        %v226 = vld [vmem:[%s185 + $0x48] sm:$0xff]
        %v227 = vld [vmem:[%s185 + $0x50] sm:$0xff]
        %v228 = vld [vmem:[%s185 + $0x58] sm:$0xff]
        %v229 = vld [vmem:[%s185 + $0x60] sm:$0xff]
        %v230 = vld [vmem:[%s185 + $0x68] sm:$0xff]
        %v231 = vld [vmem:[%s185 + $0x70] sm:$0xff]
        %v232 = vld [vmem:[%s185 + $0x78] sm:$0xff]
        %v233 = vmul.f32 %v217, %v217
        %v234 = vmul.f32 %v218, %v218
        %v235 = vmul.f32 %v219, %v219
        %v236 = vmul.f32 %v220, %v220
        %v237 = vmul.f32 %v221, %v221
        %v238 = vmul.f32 %v222, %v222
        %v239 = vmul.f32 %v223, %v223
        %v240 = vmul.f32 %v224, %v224
        %v241 = vmul.f32 %v225, %v225
        %v242 = vmul.f32 %v226, %v226
        %v243 = vmul.f32 %v227, %v227
        %v244 = vmul.f32 %v228, %v228
        %v245 = vmul.f32 %v229, %v229
        %v246 = vmul.f32 %v230, %v230
        %v247 = vmul.f32 %v231, %v231
        %v248 = vmul.f32 %v232, %v232
        %v249 = vadd.f32 %v233, %v235
        %v250 = vadd.f32 %v249, %v237
        %v251 = vadd.f32 %v250, %v239
        %v252 = vadd.f32 %v251, %v241
        %v253 = vadd.f32 %v252, %v243
        %v254 = vadd.f32 %v253, %v245
        %v255 = vadd.f32 %v254, %v247
        %v256 = vrot.slane %v255, 4
        %v257 = vadd.f32 %v255, %v256
        %v258 = vrot.slane %v257, 2
        %v259 = vadd.f32 %v257, %v258
        %v260 = vrot.slane %v259, 1
        %v261 = vadd.f32 %v259, %v260
        %v262 = vadd.f32 %v234, %v236
        %v263 = vadd.f32 %v262, %v238
        %v264 = vadd.f32 %v263, %v240
        %v265 = vadd.f32 %v264, %v242
        %v266 = vadd.f32 %v265, %v244
        %v267 = vadd.f32 %v266, %v246
        %v268 = vadd.f32 %v267, %v248
        %v269 = vrot.slane %v268, 4
        %v270 = vadd.f32 %v268, %v269
        %v271 = vrot.slane %v270, 2
        %v272 = vadd.f32 %v270, %v271
        %v273 = vrot.slane %v272, 1
        %v274 = vadd.f32 %v272, %v273
        %v275 = vmax.f32 %v261, 1e-24
        %v276 = vmax.f32 %v274, 1e-24
        %v277 = vrsqrt.pop %v275
        %v278 = vrsqrt.pop %v276
        %v279 = vmul.f32 %v217, %v277
        %v280 = vmul.f32 %v218, %v278
        %v281 = vmul.f32 %v219, %v277
        %v282 = vmul.f32 %v220, %v278
        %v283 = vmul.f32 %v221, %v277
        %v284 = vmul.f32 %v222, %v278
        %v285 = vmul.f32 %v223, %v277
        %v286 = vmul.f32 %v224, %v278
        %v287 = vmul.f32 %v225, %v277
        %v288 = vmul.f32 %v226, %v278
        %v289 = vmul.f32 %v227, %v277
        %v290 = vmul.f32 %v228, %v278
        %v291 = vmul.f32 %v229, %v277
        %v292 = vmul.f32 %v230, %v278
        %v293 = vmul.f32 %v231, %v277
        %v294 = vmul.f32 %v232, %v278
        %295 = vst [vmem:[%s205] sm:$0xff] %v279
        %296 = vst [vmem:[%s205 + $0x8] sm:$0xff] %v280
        %297 = vst [vmem:[%s205 + $0x10] sm:$0xff] %v281
        %298 = vst [vmem:[%s205 + $0x18] sm:$0xff] %v282
        %299 = vst [vmem:[%s205 + $0x20] sm:$0xff] %v283
        %300 = vst [vmem:[%s205 + $0x28] sm:$0xff] %v284
        %301 = vst [vmem:[%s205 + $0x30] sm:$0xff] %v285
        %302 = vst [vmem:[%s205 + $0x38] sm:$0xff] %v286
        %303 = vst [vmem:[%s205 + $0x40] sm:$0xff] %v287
        %304 = vst [vmem:[%s205 + $0x48] sm:$0xff] %v288
        %305 = vst [vmem:[%s205 + $0x50] sm:$0xff] %v289
        %306 = vst [vmem:[%s205 + $0x58] sm:$0xff] %v290
        %307 = vst [vmem:[%s205 + $0x60] sm:$0xff] %v291
        %308 = vst [vmem:[%s205 + $0x68] sm:$0xff] %v292
        %309 = vst [vmem:[%s205 + $0x70] sm:$0xff] %v293
        %310 = vst [vmem:[%s205 + $0x78] sm:$0xff] %v294
        %v311 = vmul.f32 %v216, %v216
        %vm312 = vcmask 523264
        %v313 = vsel %vm312, %v311, 0.0
        %314 = vadd.xlane.f32.xlu0 %v313
        %v315 = vpop.xlane.xlu0 %314
        %v316 = vmax.f32 %v315, 1e-24
        %v317 = vrsqrt.pop %v316
        %v319 = vsel %vm312, %v216, 0
        %321 = vmatprep.subr.mxu0 0.0
        %322 = vmatpush1.msra.mxu0 0.0
        %323 = vmatprep.subr.mxu0 0.0
        %324 = vmatpush1.msra.mxu0 0.0
        %325 = vmatprep.subr.mxu0 0.0
        %326 = vmatpush1.msra.mxu0 0.0
        %327 = vmatprep.subr.mxu0 0.0
        %328 = vmatpush1.msra.mxu0 0.0
        %329 = vmatprep.subr.mxu0 0.0
        %330 = vmatpush1.msra.mxu0 0.0
        %331 = vmatprep.subr.mxu0 0.0
        %332 = vmatpush1.msra.mxu0 0.0
        %333 = vmatprep.subr.mxu0 0.0
        %334 = vmatpush1.msra.mxu0 0.0
        %335 = vmatprep.subr.mxu0 0.0
        %336 = vmatpush1.msra.mxu0 0.0
        %337 = vmatprep.subr.mxu0 %v294
        %338 = vmatpush1.msra.mxu0 %v293
        %339 = vmatprep.subr.mxu0 %v292
        %340 = vmatpush1.msra.mxu0 %v291
        %341 = vmatprep.subr.mxu0 %v290
        %342 = vmatpush1.msra.mxu0 %v289
        %343 = vmatprep.subr.mxu0 %v288
        %344 = vmatpush1.msra.mxu0 %v287
        %345 = vmatprep.subr.mxu0 %v286
        %346 = vmatpush1.msra.mxu0 %v285
        %347 = vmatprep.subr.mxu0 %v284
        %348 = vmatpush1.msra.mxu0 %v283
        %349 = vmatprep.subr.mxu0 %v282
        %350 = vmatpush1.msra.mxu0 %v281
        %351 = vmatprep.subr.mxu0 %v280
        %352 = vmatpush1.msra.mxu0 %v279
        %353 = vmatprep.subr.mxu0 0.0
        %354 = vmatpush2.msra.mxu0 0.0
        %355 = vmatprep.subr.mxu0 0.0
        %356 = vmatpush2.msra.mxu0 0.0
        %357 = vmatprep.subr.mxu0 0.0
        %358 = vmatpush2.msra.mxu0 0.0
        %359 = vmatprep.subr.mxu0 0.0
        %360 = vmatpush2.msra.mxu0 0.0
        %361 = vmatprep.subr.mxu0 0.0
        %362 = vmatpush2.msra.mxu0 0.0
        %363 = vmatprep.subr.mxu0 0.0
        %364 = vmatpush2.msra.mxu0 0.0
        %365 = vmatprep.subr.mxu0 0.0
        %366 = vmatpush2.msra.mxu0 0.0
        %367 = vmatprep.subr.mxu0 0.0
        %368 = vmatpush2.msra.mxu0 0.0
        %369 = vmatprep.subr.mxu0 0.0
        %370 = vmatpush2.msra.mxu0 0.0
        %371 = vmatprep.subr.mxu0 0.0
        %372 = vmatpush2.msra.mxu0 0.0
        %373 = vmatprep.subr.mxu0 0.0
        %374 = vmatpush2.msra.mxu0 0.0
        %375 = vmatprep.subr.mxu0 0.0
        %376 = vmatpush2.msra.mxu0 0.0
        %377 = vmatprep.subr.mxu0 0.0
        %378 = vmatpush2.msra.mxu0 0.0
        %379 = vmatprep.subr.mxu0 0.0
        %380 = vmatpush2.msra.mxu0 0.0
        %381 = vmatprep.subr.mxu0 0.0
        %382 = vmatpush2.msra.mxu0 0.0
        %383 = vmatprep.subr.mxu0 0.0
        %384 = vmatpush2.msra.mxu0 0.0
        %385 = vmatprep.mubr.f32.mxu0 0.0
        %386 = vmatmul.mubr.f32.gmra.mxu0 %v319
        %v387 = vpop.f32.mrf.mxu0
        %v388 = vadd.f32 0.0, %v387
        %v389 = vpop.f32.mrf.mxu0
        %v390 = vadd.f32 0.0, %v389
        %391 = vdwg.mxu0
        %v392 = vmul.f32 %v388, %v317
        %v393 = vmul.f32 %v390, %v317
        %394 = vst [vmem:[%s212] sm:$0xff] %v392
        %395 = vst [vmem:[%s212 + $0x8] sm:$0xff] %v393
        %s396 = sand.u32 %s80, 1
        %s397 = scalar_lea.sflag [#allocation4], %s396
        %s398 = sand.u32 %s80, 1
        %s399 = smul.addr %s398, 128
        %s400 = scalar_lea.vmem [#allocation7], %s399
        %s401 = sand.u32 %s106, 1
        %s402 = scalar_lea.sflag [#allocation9], %s401
        %s403 = sand.u32 %s106, 1
        %s404 = smul.addr %s403, 16
        %s405 = scalar_lea.vmem [#allocation8], %s404
        // Predicated region
        $region37: #{tpu_custom_call.1} parent=27 // pred_check
          %p406 = pneg %p90
        $region38: #{tpu_custom_call.1} parent=27 // pred_check_branch
          %408 = sbr.rel (%p406) target = $region40
        $region39: #{tpu_custom_call.1} parent=27 // pred_region
          %s409 = smul.u32 2, %s25
          %s411 = ssub.s32 2048, 2048
          %412 = vsyncadd %s397, %s411
          %s413 = smul.addr %s409, 128
          %s414 = scalar_lea.hbm %s2, %s413
          %s415 = sshll.u32 %s400, 4
          %s416 = int_to_ptr.vmem [resolvable:$true] %s415
          %421 = dma.vmem_to_hbm [thread:$0]  %s416, 2048, %s414, %s397, 256, 512, 16
        $region40: #{tpu_custom_call.1} parent=27 // pred_fallthru
          _
        // Predicated region
        $region41: #{tpu_custom_call.1} parent=27 // pred_check
          %p422 = pneg %p116
        $region42: #{tpu_custom_call.1} parent=27 // pred_check_branch
          %424 = sbr.rel (%p422) target = $region44
        $region43: #{tpu_custom_call.1} parent=27 // pred_region
          %s425 = smul.u32 2, %s25
          %s427 = ssub.s32 256, 256
          %428 = vsyncadd %s402, %s427
          %s429 = smul.addr %s425, 128
          %s430 = scalar_lea.hbm %s3, %s429
          %s432 = sshll.u32 %s405, 4
          %s433 = int_to_ptr.vmem [resolvable:$true] %s432
          %435 = dma.vmem_to_hbm [thread:$0]  %s433, 256, %s430, %s402
        $region44: #{tpu_custom_call.1} parent=27 // pred_fallthru
          _
      $region28: #{tpu_custom_call.1} parent=5 // pred_fallthru
        _
      %p436 = scmp.le.s32.totalorder 2, %s20
      // Predicated region
      $region45: #{tpu_custom_call.1} parent=5 // pred_check
        %p437 = pneg %p436
      $region46: #{tpu_custom_call.1} parent=5 // pred_check_branch
        %439 = sbr.rel (%p437) target = $region48
      $region47: #{tpu_custom_call.1} parent=5 // pred_region
        %s440 = ssub.s32 %s20, 2
        // Predicated region
        $region49: #{tpu_custom_call.1} parent=47 // pred_check
          %p441 = pneg %p96
        $region50: #{tpu_custom_call.1} parent=47 // pred_check_branch
          %443 = sbr.rel (%p441) target = $region52
        $region51: #{tpu_custom_call.1} parent=47 // pred_region
          %s444 = sand.u32 %s81, 1
          %s445 = scalar_lea.sflag [#allocation4], %s444
          %s446 = sand.u32 %s81, 1
          %s447 = smul.addr %s446, 128
          %s448 = scalar_lea.vmem [#allocation7], %s447
          %449 = dma.done %s445, 2048
        $region52: #{tpu_custom_call.1} parent=47 // pred_fallthru
          _
        // Predicated region
        $region53: #{tpu_custom_call.1} parent=47 // pred_check
          %p450 = pneg %p122
        $region54: #{tpu_custom_call.1} parent=47 // pred_check_branch
          %452 = sbr.rel (%p450) target = $region56
        $region55: #{tpu_custom_call.1} parent=47 // pred_region
          %s453 = sand.u32 %s107, 1
          %s454 = scalar_lea.sflag [#allocation9], %s453
          %s455 = sand.u32 %s107, 1
          %s456 = smul.addr %s455, 16
          %s457 = scalar_lea.vmem [#allocation8], %s456
          %458 = dma.done %s454, 256
        $region56: #{tpu_custom_call.1} parent=47 // pred_fallthru
          _
      $region48: #{tpu_custom_call.1} parent=5 // pred_fallthru
        _
    $region6: #{tpu_custom_call.1} parent=1 // loop_footer
      %s24 = sadd.s32 1, %s20
    $region7: #{tpu_custom_call.1} parent=1 // loop_footer_branch
      %19 = sbr.rel target = $region3
    $region8: #{tpu_custom_call.1} parent=1 // loop_exit
      _
    %459 = vsyncpa [#allocation3], 1
    %s460 = scalar_lea.sflag [#allocation3], 1
    %461 = vsyncpa %s460, 1
    %462 = vsyncpa [#allocation6], 1
    %s463 = scalar_lea.sflag [#allocation6], 1
    %464 = vsyncpa %s463, 1
    %465 = vsyncpa [#allocation4], 1
    %s466 = scalar_lea.sflag [#allocation4], 1
    %467 = vsyncpa %s466, 1
    %468 = vsyncpa [#allocation9], 1
    %s469 = scalar_lea.sflag [#allocation9], 1
    %470 = vsyncpa %s469, 1

</llo_original>
